<compile_context>
chip_gen: v7x
topology: tpu7x:2x2x1
jax: 0.10.0
libtpu: 0.0.40
codegen_flags: <defaults>
</compile_context>

<pallas_src>
import functools

import jax
import jax.numpy as jnp
from jax.experimental import pallas as pl
from jax.experimental.pallas import tpu as pltpu


_LANE = 128
_SUBLANE = 8


def _round_up(x, m):
    return ((x + m - 1) // m) * m


def _make_kernel(num_parts, dp_pad):
    """Kernel with the static part count / per-part lane stride baked in."""

    def kernel(emb_ref,    # [BT, Demb]          concat(task,obj,state) rows (unpadded width)
               parts_ref,  # [BT, P*F]           raw part features, flattened per object
               wpb_ref,    # [P*F, P*Dp_pad]     block-diagonal part-encoder weight
               bpb_ref,    # [1, P*Dp_pad]       tiled part-encoder bias (f32)
               we_ref,     # [Demb, De_pad]      propagation weight, emb rows
               wpl_ref,    # [Dp_pad, De_pad]    propagation weight, pool rows
               b_ref,      # [1, De_pad]         propagation bias (f32)
               out_ref):   # [BT, De_pad]
        # --- part encoder: one MXU dot gives every part of every object ---
        pe = jnp.dot(parts_ref[...], wpb_ref[...],
                     preferred_element_type=jnp.float32)       # [BT, P*Dp_pad]
        pe = jnp.maximum(pe + bpb_ref[...], 0.0)

        # --- max pooling over parts: each part occupies its own 128-lane
        #     aligned slice, so this is a chain of free vreg selects + VPU max ---
        pool = pe[:, :dp_pad]
        for p in range(1, num_parts):
            pool = jnp.maximum(pool, pe[:, p * dp_pad:(p + 1) * dp_pad])

        # --- object_propagation as two accumulated dots (no concat scratch) ---
        h = jnp.dot(emb_ref[...], we_ref[...],
                    preferred_element_type=jnp.float32)
        h = h + jnp.dot(pool.astype(wpl_ref.dtype), wpl_ref[...],
                        preferred_element_type=jnp.float32)
        out_ref[...] = jnp.maximum(h + b_ref[...], 0.0)

    return kernel


@functools.partial(jax.jit,
                   static_argnames=("out_dim", "block_b", "vmem_limit_bytes"))
def object_encoder_forward(task_idx, obj_idx, state_idx, parts, kp, *,
                           out_dim, block_b=128, vmem_limit_bytes=None):
    """Batched forward.

    parts: [B, P, F] float32, *_idx: [B] int32.
    block_b: batch tile; pass 128-512 (cap ~1024 on v7x) for real batch sizes.
    """
    B, P, F = parts.shape
    assert P >= 1, "max-pool over zero parts is undefined (PyTorch would error)"

    kf = kp["wpb"].shape[0]
    assert kf == P * F, "prepare_params was built for a different num_parts/F"
    dp_pad = kp["wpb"].shape[1] // P
    demb = kp["task_tab"].shape[1] + kp["obj_tab"].shape[1] + kp["state_tab"].shape[1]
    de_pad = kp["w_pool"].shape[1]
    wdtype = kp["wpb"].dtype

    # Effective tile: multiple of 8 sublanes, never larger than the padded batch.
    bt = _round_up(min(block_b, _round_up(B, _SUBLANE)), _SUBLANE)
    b_pad = _round_up(B, bt)

    # Embedding lookups + concat (tiny [B, demb] array; wrapper glue).
    emb = jnp.concatenate([kp["task_tab"][task_idx],
                           kp["obj_tab"][obj_idx],
                           kp["state_tab"][state_idx]], axis=-1).astype(wdtype)
    # Flatten parts per object: contiguous reshape, no extra HBM traffic.
    parts2d = parts.reshape(B, P * F).astype(wdtype)
    if b_pad != B:
        emb = jnp.pad(emb, ((0, b_pad - B), (0, 0)))
        parts2d = jnp.pad(parts2d, ((0, b_pad - B), (0, 0)))

    kernel = _make_kernel(num_parts=P, dp_pad=dp_pad)

    cp_kwargs = dict(dimension_semantics=("parallel",))
    if vmem_limit_bytes is not None:
        cp_kwargs["vmem_limit_bytes"] = vmem_limit_bytes

    out = pl.pallas_call(
        kernel,
        out_shape=jax.ShapeDtypeStruct((b_pad, de_pad), jnp.float32),
        grid_spec=pltpu.PrefetchScalarGridSpec(
            num_scalar_prefetch=0,
            grid=(b_pad // bt,),
            in_specs=[
                pl.BlockSpec((bt, demb), lambda i: (i, 0)),
                pl.BlockSpec((bt, P * F), lambda i: (i, 0)),
                pl.BlockSpec((P * F, P * dp_pad), lambda i: (0, 0)),
                pl.BlockSpec((1, P * dp_pad), lambda i: (0, 0)),
                pl.BlockSpec((demb, de_pad), lambda i: (0, 0)),
                pl.BlockSpec((dp_pad, de_pad), lambda i: (0, 0)),
                pl.BlockSpec((1, de_pad), lambda i: (0, 0)),
            ],
            out_specs=pl.BlockSpec((bt, de_pad), lambda i: (i, 0)),
        ),
        compiler_params=pltpu.CompilerParams(**cp_kwargs),
    )(emb, parts2d, kp["wpb"], kp["bpb"], kp["w_emb"], kp["w_pool"], kp["b"])

    return out[:B, :out_dim]


def prepare_params(raw, num_parts, dtype=jnp.float32):
    """One-time conversion of PyTorch-layout params into kernel layout.

    dtype: pass jnp.bfloat16 on v6e/v7x to halve HBM/VMEM traffic (accumulation
    stays f32); keep f32 when 1e-5 accuracy is required.
    """
    dt = raw["task_embeddings"].shape[1]
    do = raw["object_embeddings"].shape[1]
    ds = raw["state_embeddings"].shape[1]
    dp, f = raw["part_encoder_w"].shape            # nn.Linear layout: [out, in]
    de, _ = raw["object_propagation_w"].shape
    demb = dt + do + ds
    P = int(num_parts)

    dp_pad = _round_up(dp, _LANE)
    de_pad = _round_up(de, _LANE)

    # Block-diagonal part-encoder weight: part p's features hit rows p*F:(p+1)*F
    # and its encoding lands in lanes [p*dp_pad, p*dp_pad+dp) -> one dot encodes
    # every part and the pool reduces over 128-lane-aligned slices.
    wp_t = raw["part_encoder_w"].T.astype(dtype)                 # [F, dp]
    wpb = jnp.zeros((P * f, P * dp_pad), dtype)
    bpb = jnp.zeros((1, P * dp_pad), jnp.float32)
    bp = raw["part_encoder_b"].astype(jnp.float32)
    for p in range(P):
        wpb = wpb.at[p * f:(p + 1) * f, p * dp_pad:p * dp_pad + dp].set(wp_t)
        bpb = bpb.at[0, p * dp_pad:p * dp_pad + dp].set(bp)

    # object_propagation: concat(emb, pool) @ W.T + b  ==  emb @ W_emb + pool @ W_pool + b
    w_t = raw["object_propagation_w"].T.astype(jnp.float32)     # [demb+dp, de]
    w_emb = jnp.zeros((demb, de_pad), dtype).at[:, :de].set(w_t[:demb].astype(dtype))
    w_pool = jnp.zeros((dp_pad, de_pad), dtype).at[:dp, :de].set(w_t[demb:].astype(dtype))
    b = jnp.zeros((1, de_pad), jnp.float32).at[0, :de].set(
        raw["object_propagation_b"].astype(jnp.float32))

    return {
        "task_tab": raw["task_embeddings"].astype(jnp.float32),
        "obj_tab": raw["object_embeddings"].astype(jnp.float32),
        "state_tab": raw["state_embeddings"].astype(jnp.float32),
        "wpb": wpb, "bpb": bpb, "w_emb": w_emb, "w_pool": w_pool, "b": b,
    }


def init_params(key,
                n_tasks, n_objects, n_states,
                task_embedding_dim, object_embedding_dim, state_embedding_dim,
                part_feat_dim, part_encoder_dim, object_encoder_dim):
    """Raw params in PyTorch (nn.Linear [out, in]) layout."""
    ks = jax.random.split(key, 7)
    in_dim = (part_encoder_dim + task_embedding_dim
              + object_embedding_dim + state_embedding_dim)
    return {
        "task_embeddings": jax.random.normal(
            ks[0], (n_tasks, task_embedding_dim), jnp.float32),
        "object_embeddings": jax.random.normal(
            ks[1], (n_objects, object_embedding_dim), jnp.float32),
        "state_embeddings": jax.random.normal(
            ks[2], (n_states, state_embedding_dim), jnp.float32),
        "part_encoder_w": 0.1 * jax.random.normal(
            ks[3], (part_encoder_dim, part_feat_dim), jnp.float32),
        "part_encoder_b": 0.1 * jax.random.normal(
            ks[4], (part_encoder_dim,), jnp.float32),
        "object_propagation_w": 0.1 * jax.random.normal(
            ks[5], (object_encoder_dim, in_dim), jnp.float32),
        "object_propagation_b": 0.1 * jax.random.normal(
            ks[6], (object_encoder_dim,), jnp.float32),
    }


def _reference_batch(task_idx, obj_idx, state_idx, parts, raw):
    """Pure-JAX batched reference mirroring the PyTorch forward per object."""
    def one(t, o, s, pp):
        pe = jnp.maximum(
            pp @ raw["part_encoder_w"].T + raw["part_encoder_b"], 0.0)
        pool = jnp.max(pe, axis=0)
        emb = jnp.concatenate([raw["task_embeddings"][t],
                               raw["object_embeddings"][o],
                               raw["state_embeddings"][s],
                               pool])
        return jnp.maximum(
            emb @ raw["object_propagation_w"].T + raw["object_propagation_b"], 0.0)
    return jax.vmap(one)(task_idx, obj_idx, state_idx, parts)


if __name__ == "__main__":
    key = jax.random.PRNGKey(0)

    # synthetic vocab sizes (DataSpecification is not available)
    n_tasks, n_objects, n_states = 3, 5, 4

    task_embedding_dim = 8
    object_embedding_dim = 8
    state_embedding_dim = 8
    part_feat_dim = 16
    part_encoder_dim = 16
    object_encoder_dim = 32
    batch = 40
    num_parts = 5

    k_params, k_parts, k_t, k_o, k_s = jax.random.split(key, 5)
    raw = init_params(k_params, n_tasks, n_objects, n_states,
                      task_embedding_dim, object_embedding_dim,
                      state_embedding_dim, part_feat_dim,
                      part_encoder_dim, object_encoder_dim)
    kparams = prepare_params(raw, num_parts=num_parts)   # one-time kernel layout

    parts = jax.random.normal(
        k_parts, (batch, num_parts, part_feat_dim), jnp.float32)
    task_idx = jax.random.randint(k_t, (batch,), 0, n_tasks, jnp.int32)
    obj_idx = jax.random.randint(k_o, (batch,), 0, n_objects, jnp.int32)
    state_idx = jax.random.randint(k_s, (batch,), 0, n_states, jnp.int32)

    ref = _reference_batch(task_idx, obj_idx, state_idx, parts, raw)

    # Default (large) tile: single grid step at this toy batch size.
    out = object_encoder_forward(task_idx, obj_idx, state_idx, parts, kparams,
                                 out_dim=object_encoder_dim)
    out = jax.block_until_ready(out)
    assert out.shape == (batch, object_encoder_dim)
    assert jnp.allclose(out, ref, atol=1e-5, rtol=1e-5), "mismatch (block_b=128)"

    # Small tile: exercises a multi-step grid and batch padding (40 -> 48).
    out2 = object_encoder_forward(task_idx, obj_idx, state_idx, parts, kparams,
                                  out_dim=object_encoder_dim, block_b=16)
    out2 = jax.block_until_ready(out2)
    assert jnp.allclose(out2, ref, atol=1e-5, rtol=1e-5), "mismatch (block_b=16)"

    print("KERNEL_OK")
</pallas_src>

<mosaic_0001>
module attributes {stable_mosaic.version = 11 : i64} {
  func.func @kernel(%arg0: i32, %arg1: memref<40x24xf32, #tpu.memory_space<vmem>>, %arg2: memref<40x80xf32, #tpu.memory_space<vmem>>, %arg3: memref<80x640xf32, #tpu.memory_space<vmem>>, %arg4: memref<1x640xf32, #tpu.memory_space<vmem>>, %arg5: memref<24x128xf32, #tpu.memory_space<vmem>>, %arg6: memref<128x128xf32, #tpu.memory_space<vmem>>, %arg7: memref<1x128xf32, #tpu.memory_space<vmem>>, %arg8: memref<40x128xf32, #tpu.memory_space<vmem>>) attributes {dimension_semantics = [#tpu.dimension_semantics<parallel>], iteration_bounds = array<i64: 1>, scalar_prefetch = 0 : i64, scratch_operands = 0 : i64, tpu.core_type = #tpu.core_type<tc>, window_params = [{transform_indices = @transform_0, window_bounds = array<i64: 40, 24>}, {transform_indices = @transform_1, window_bounds = array<i64: 40, 80>}, {pipeline_mode = #tpu.pipeline_mode<synchronous>, transform_indices = @transform_2, window_bounds = array<i64: 80, 640>}, {pipeline_mode = #tpu.pipeline_mode<synchronous>, transform_indices = @transform_3, window_bounds = array<i64: 1, 640>}, {pipeline_mode = #tpu.pipeline_mode<synchronous>, transform_indices = @transform_4, window_bounds = array<i64: 24, 128>}, {pipeline_mode = #tpu.pipeline_mode<synchronous>, transform_indices = @transform_5, window_bounds = array<i64: 128, 128>}, {pipeline_mode = #tpu.pipeline_mode<synchronous>, transform_indices = @transform_6, window_bounds = array<i64: 1, 128>}, {transform_indices = @transform_7, window_bounds = array<i64: 40, 128>}]} {
    %c0 = arith.constant 0 : index
    %c0_0 = arith.constant 0 : index
    %0 = vector.load %arg2[%c0, %c0_0] : memref<40x80xf32, #tpu.memory_space<vmem>>, vector<40x80xf32>
    %c0_1 = arith.constant 0 : index
    %c0_2 = arith.constant 0 : index
    %1 = vector.load %arg3[%c0_1, %c0_2] : memref<80x640xf32, #tpu.memory_space<vmem>>, vector<80x640xf32>
    %cst = arith.constant dense<0.000000e+00> : vector<40x640xf32>
    %2 = tpu.matmul %0, %1, %cst {dimension_numbers = #tpu.dot_dimension_numbers<[1], [0], [0], [1], [0, 0, 1, 1], [], []>} : vector<40x80xf32>, vector<80x640xf32>, vector<40x640xf32> -> vector<40x640xf32>
    %c0_3 = arith.constant 0 : index
    %c0_4 = arith.constant 0 : index
    %3 = vector.load %arg4[%c0_3, %c0_4] : memref<1x640xf32, #tpu.memory_space<vmem>>, vector<1x640xf32>
    %4 = vector.broadcast %3 : vector<1x640xf32> to vector<40x640xf32>
    %5 = arith.addf %2, %4 : vector<40x640xf32>
    %cst_5 = arith.constant 0.000000e+00 : f32
    %6 = vector.broadcast %cst_5 : f32 to vector<40x640xf32>
    %7 = arith.maximumf %5, %6 : vector<40x640xf32>
    %8 = vector.extract_strided_slice %7 {offsets = [0, 0], sizes = [40, 128], strides = [1, 1]} : vector<40x640xf32> to vector<40x128xf32>
    %9 = vector.extract_strided_slice %7 {offsets = [0, 128], sizes = [40, 128], strides = [1, 1]} : vector<40x640xf32> to vector<40x128xf32>
    %10 = arith.maximumf %8, %9 : vector<40x128xf32>
    %11 = vector.extract_strided_slice %7 {offsets = [0, 256], sizes = [40, 128], strides = [1, 1]} : vector<40x640xf32> to vector<40x128xf32>
    %12 = arith.maximumf %10, %11 : vector<40x128xf32>
    %13 = vector.extract_strided_slice %7 {offsets = [0, 384], sizes = [40, 128], strides = [1, 1]} : vector<40x640xf32> to vector<40x128xf32>
    %14 = arith.maximumf %12, %13 : vector<40x128xf32>
    %15 = vector.extract_strided_slice %7 {offsets = [0, 512], sizes = [40, 128], strides = [1, 1]} : vector<40x640xf32> to vector<40x128xf32>
    %16 = arith.maximumf %14, %15 : vector<40x128xf32>
    %c0_6 = arith.constant 0 : index
    %c0_7 = arith.constant 0 : index
    %17 = vector.load %arg1[%c0_6, %c0_7] : memref<40x24xf32, #tpu.memory_space<vmem>>, vector<40x24xf32>
    %c0_8 = arith.constant 0 : index
    %c0_9 = arith.constant 0 : index
    %18 = vector.load %arg5[%c0_8, %c0_9] : memref<24x128xf32, #tpu.memory_space<vmem>>, vector<24x128xf32>
    %cst_10 = arith.constant dense<0.000000e+00> : vector<40x128xf32>
    %19 = tpu.matmul %17, %18, %cst_10 {dimension_numbers = #tpu.dot_dimension_numbers<[1], [0], [0], [1], [0, 0, 1, 1], [], []>} : vector<40x24xf32>, vector<24x128xf32>, vector<40x128xf32> -> vector<40x128xf32>
    %c0_11 = arith.constant 0 : index
    %c0_12 = arith.constant 0 : index
    %20 = vector.load %arg6[%c0_11, %c0_12] : memref<128x128xf32, #tpu.memory_space<vmem>>, vector<128x128xf32>
    %cst_13 = arith.constant dense<0.000000e+00> : vector<40x128xf32>
    %21 = tpu.matmul %16, %20, %cst_13 {dimension_numbers = #tpu.dot_dimension_numbers<[1], [0], [0], [1], [0, 0, 1, 1], [], []>} : vector<40x128xf32>, vector<128x128xf32>, vector<40x128xf32> -> vector<40x128xf32>
    %22 = arith.addf %19, %21 : vector<40x128xf32>
    %c0_14 = arith.constant 0 : index
    %c0_15 = arith.constant 0 : index
    %23 = vector.load %arg7[%c0_14, %c0_15] : memref<1x128xf32, #tpu.memory_space<vmem>>, vector<1x128xf32>
    %24 = vector.broadcast %23 : vector<1x128xf32> to vector<40x128xf32>
    %25 = arith.addf %22, %24 : vector<40x128xf32>
    %cst_16 = arith.constant 0.000000e+00 : f32
    %26 = vector.broadcast %cst_16 : f32 to vector<40x128xf32>
    %27 = arith.maximumf %25, %26 : vector<40x128xf32>
    %c0_17 = arith.constant 0 : index
    %c0_18 = arith.constant 0 : index
    %28 = vector.load %arg8[%c0_17, %c0_18] : memref<40x128xf32, #tpu.memory_space<vmem>>, vector<40x128xf32>
    tpu.vector_store %arg8[%c0_17, %c0_18], %27 {strides = array<i32>} : memref<40x128xf32, #tpu.memory_space<vmem>>, vector<40x128xf32>,
    return
  }
  func.func @transform_0(%arg0: i32) -> (i32, i32) {
    %c0_i32 = arith.constant 0 : i32
    %c0_i32_0 = arith.constant 0 : i32
    return %arg0, %c0_i32 : i32, i32
  }
  func.func @transform_1(%arg0: i32) -> (i32, i32) {
    %c0_i32 = arith.constant 0 : i32
    %c0_i32_0 = arith.constant 0 : i32
    return %arg0, %c0_i32 : i32, i32
  }
  func.func @transform_2(%arg0: i32) -> (i32, i32) {
    %c0_i32 = arith.constant 0 : i32
    %c0_i32_0 = arith.constant 0 : i32
    %c0_i32_1 = arith.constant 0 : i32
    return %c0_i32, %c0_i32_0 : i32, i32
  }
  func.func @transform_3(%arg0: i32) -> (i32, i32) {
    %c0_i32 = arith.constant 0 : i32
    %c0_i32_0 = arith.constant 0 : i32
    %c0_i32_1 = arith.constant 0 : i32
    return %c0_i32, %c0_i32_0 : i32, i32
  }
  func.func @transform_4(%arg0: i32) -> (i32, i32) {
    %c0_i32 = arith.constant 0 : i32
    %c0_i32_0 = arith.constant 0 : i32
    %c0_i32_1 = arith.constant 0 : i32
    return %c0_i32, %c0_i32_0 : i32, i32
  }
  func.func @transform_5(%arg0: i32) -> (i32, i32) {
    %c0_i32 = arith.constant 0 : i32
    %c0_i32_0 = arith.constant 0 : i32
    %c0_i32_1 = arith.constant 0 : i32
    return %c0_i32, %c0_i32_0 : i32, i32
  }
  func.func @transform_6(%arg0: i32) -> (i32, i32) {
    %c0_i32 = arith.constant 0 : i32
    %c0_i32_0 = arith.constant 0 : i32
    %c0_i32_1 = arith.constant 0 : i32
    return %c0_i32, %c0_i32_0 : i32, i32
  }
  func.func @transform_7(%arg0: i32) -> (i32, i32) {
    %c0_i32 = arith.constant 0 : i32
    %c0_i32_0 = arith.constant 0 : i32
    return %arg0, %c0_i32 : i32, i32
  }
}

</mosaic_0001>

<llo_original>
// kernel: object_encoder_forward.1
$region0: #{object_encoder_forward.1}
  #allocation0 [shape = 'u32[]', space=smem, size = 0x4, offset = 0x4, fixed_abs, tag = 'smem constant byte address 0x4 - core index']
  #allocation1 [shape = 'u32[144,128]{1,0:T(1,128)}', space=vmem, size = 0x12000, scoped, tag = 'internal scratch']
  %s0 = inlined_call_operand.vmem [shape: f32[40,24], index: 0, kind: input, shape index: {}]
  %s1 = inlined_call_operand.vmem [shape: f32[40,80], index: 1, kind: input, shape index: {}]
  %s2 = inlined_call_operand.vmem [shape: f32[80,640], index: 2, kind: input, shape index: {}]
  %s3 = inlined_call_operand.vmem [shape: f32[1,640], index: 3, kind: input, shape index: {}]
  %s4 = inlined_call_operand.vmem [shape: f32[24,128], index: 4, kind: input, shape index: {}]
  %s5 = inlined_call_operand.vmem [shape: f32[128,128], index: 5, kind: input, shape index: {}]
  %s6 = inlined_call_operand.vmem [shape: f32[1,128], index: 6, kind: input, shape index: {}]
  %s7 = inlined_call_operand.vmem [shape: f32[40,128], index: 7, kind: output, shape index: {}]
  %s8 = sld [smem:[#allocation0]]
  $region38: #{object_encoder_forward.1} parent=0
    _
  %s10 = ssub.s32 1, %s8
  %s11 = scalar_select 0, %s10, %s8
  // Predicated region
  $region2: #{object_encoder_forward.1} parent=0 // pred_check
    _
  $region3: #{object_encoder_forward.1} parent=0 // pred_check_branch
    %13 = sbr.rel (0) target = $region5
  $region4: #{object_encoder_forward.1} parent=0 // pred_region
    _
  $region5: #{object_encoder_forward.1} parent=0 // pred_fallthru
    _
  // Predicated region
  $region6: #{object_encoder_forward.1} parent=0 // pred_check
    _
  $region7: #{object_encoder_forward.1} parent=0 // pred_check_branch
    %15 = sbr.rel (0) target = $region9
  $region8: #{object_encoder_forward.1} parent=0 // pred_region
    _
  $region9: #{object_encoder_forward.1} parent=0 // pred_fallthru
    _
  // Predicated region
  $region10: #{object_encoder_forward.1} parent=0 // pred_check
    _
  $region11: #{object_encoder_forward.1} parent=0 // pred_check_branch
    %17 = sbr.rel (0) target = $region13
  $region12: #{object_encoder_forward.1} parent=0 // pred_region
    _
  $region13: #{object_encoder_forward.1} parent=0 // pred_fallthru
    _
  // Predicated region
  $region14: #{object_encoder_forward.1} parent=0 // pred_check
    _
  $region15: #{object_encoder_forward.1} parent=0 // pred_check_branch
    %19 = sbr.rel (0) target = $region17
  $region16: #{object_encoder_forward.1} parent=0 // pred_region
    _
  $region17: #{object_encoder_forward.1} parent=0 // pred_fallthru
    _
  // Predicated region
  $region18: #{object_encoder_forward.1} parent=0 // pred_check
    _
  $region19: #{object_encoder_forward.1} parent=0 // pred_check_branch
    %21 = sbr.rel (0) target = $region21
  $region20: #{object_encoder_forward.1} parent=0 // pred_region
    _
  $region21: #{object_encoder_forward.1} parent=0 // pred_fallthru
    _
  // Predicated region
  $region22: #{object_encoder_forward.1} parent=0 // pred_check
    _
  $region23: #{object_encoder_forward.1} parent=0 // pred_check_branch
    %23 = sbr.rel (0) target = $region25
  $region24: #{object_encoder_forward.1} parent=0 // pred_region
    _
  $region25: #{object_encoder_forward.1} parent=0 // pred_fallthru
    _
  // Predicated region
  $region26: #{object_encoder_forward.1} parent=0 // pred_check
    _
  $region27: #{object_encoder_forward.1} parent=0 // pred_check_branch
    %25 = sbr.rel (0) target = $region29
  $region28: #{object_encoder_forward.1} parent=0 // pred_region
    _
  $region29: #{object_encoder_forward.1} parent=0 // pred_fallthru
    _
  %v26 = vld [vmem:[%s1] sm:$0xff]
  %v27 = vld [vmem:[%s1 + $0x8] sm:$0xff]
  %v28 = vld [vmem:[%s1 + $0x10] sm:$0xff]
  %v29 = vld [vmem:[%s1 + $0x18] sm:$0xff]
  %v30 = vld [vmem:[%s1 + $0x20] sm:$0xff]
  %v31 = vld [vmem:[%s2] sm:$0xff]
  %v32 = vld [vmem:[%s2 + $0x8] sm:$0xff]
  %v33 = vld [vmem:[%s2 + $0x10] sm:$0xff]
  %v34 = vld [vmem:[%s2 + $0x18] sm:$0xff]
  %v35 = vld [vmem:[%s2 + $0x20] sm:$0xff]
  %v36 = vld [vmem:[%s2 + $0x28] sm:$0xff]
  %v37 = vld [vmem:[%s2 + $0x30] sm:$0xff]
  %v38 = vld [vmem:[%s2 + $0x38] sm:$0xff]
  %v39 = vld [vmem:[%s2 + $0x40] sm:$0xff]
  %v40 = vld [vmem:[%s2 + $0x48] sm:$0xff]
  %v41 = vld [vmem:[%s2 + $0x50] sm:$0xff]
  %v42 = vld [vmem:[%s2 + $0x58] sm:$0xff]
  %v43 = vld [vmem:[%s2 + $0x60] sm:$0xff]
  %v44 = vld [vmem:[%s2 + $0x68] sm:$0xff]
  %v45 = vld [vmem:[%s2 + $0x70] sm:$0xff]
  %v46 = vld [vmem:[%s2 + $0x78] sm:$0xff]
  %v47 = vld [vmem:[%s2 + $0x80] sm:$0xff]
  %v48 = vld [vmem:[%s2 + $0x88] sm:$0xff]
  %v49 = vld [vmem:[%s2 + $0x90] sm:$0xff]
  %v50 = vld [vmem:[%s2 + $0x98] sm:$0xff]
  %v51 = vld [vmem:[%s2 + $0xa0] sm:$0xff]
  %v52 = vld [vmem:[%s2 + $0xa8] sm:$0xff]
  %v53 = vld [vmem:[%s2 + $0xb0] sm:$0xff]
  %v54 = vld [vmem:[%s2 + $0xb8] sm:$0xff]
  %v55 = vld [vmem:[%s2 + $0xc0] sm:$0xff]
  %v56 = vld [vmem:[%s2 + $0xc8] sm:$0xff]
  %v57 = vld [vmem:[%s2 + $0xd0] sm:$0xff]
  %v58 = vld [vmem:[%s2 + $0xd8] sm:$0xff]
  %v59 = vld [vmem:[%s2 + $0xe0] sm:$0xff]
  %v60 = vld [vmem:[%s2 + $0xe8] sm:$0xff]
  %v61 = vld [vmem:[%s2 + $0xf0] sm:$0xff]
  %v62 = vld [vmem:[%s2 + $0xf8] sm:$0xff]
  %v63 = vld [vmem:[%s2 + $0x100] sm:$0xff]
  %v64 = vld [vmem:[%s2 + $0x108] sm:$0xff]
  %v65 = vld [vmem:[%s2 + $0x110] sm:$0xff]
  %v66 = vld [vmem:[%s2 + $0x118] sm:$0xff]
  %v67 = vld [vmem:[%s2 + $0x120] sm:$0xff]
  %v68 = vld [vmem:[%s2 + $0x128] sm:$0xff]
  %v69 = vld [vmem:[%s2 + $0x130] sm:$0xff]
  %v70 = vld [vmem:[%s2 + $0x138] sm:$0xff]
  %v71 = vld [vmem:[%s2 + $0x140] sm:$0xff]
  %v72 = vld [vmem:[%s2 + $0x148] sm:$0xff]
  %v73 = vld [vmem:[%s2 + $0x150] sm:$0xff]
  %v74 = vld [vmem:[%s2 + $0x158] sm:$0xff]
  %v75 = vld [vmem:[%s2 + $0x160] sm:$0xff]
  %v76 = vld [vmem:[%s2 + $0x168] sm:$0xff]
  %v77 = vld [vmem:[%s2 + $0x170] sm:$0xff]
  %v78 = vld [vmem:[%s2 + $0x178] sm:$0xff]
  %v79 = vld [vmem:[%s2 + $0x180] sm:$0xff]
  %v80 = vld [vmem:[%s2 + $0x188] sm:$0xff]
  %v81 = vld [vmem:[%s3] sm:$0x1f]
  %v83 = vlaneseq
  %v84 = vshrl.u32 %v83, 7
  %v85 = vsub.s32 0, %v84
  %v86 = vrot.slane %v81, %v85
  %v87 = vlaneseq
  %v88 = vshrl.u32 %v87, 7
  %v89 = vsub.s32 1, %v88
  %v90 = vrot.slane %v81, %v89
  %v91 = vlaneseq
  %v92 = vshrl.u32 %v91, 7
  %v93 = vsub.s32 2, %v92
  %v94 = vrot.slane %v81, %v93
  %v95 = vlaneseq
  %v96 = vshrl.u32 %v95, 7
  %v97 = vsub.s32 3, %v96
  %v98 = vrot.slane %v81, %v97
  %v99 = vlaneseq
  %v100 = vshrl.u32 %v99, 7
  %v101 = vsub.s32 4, %v100
  %v102 = vrot.slane %v81, %v101
  %vm108 = vcmask 654336
  %v110 = vsel %vm108, %v26, 0
  %v113 = vsel %vm108, %v27, 0
  %v116 = vsel %vm108, %v28, 0
  %v119 = vsel %vm108, %v29, 0
  %v122 = vsel %vm108, %v30, 0
  %124 = vmatprep.subr.mxu0 %v32
  %125 = vmatpush1.msra.mxu0 %v31
  %126 = vmatprep.subr.mxu0 %v37
  %127 = vmatpush1.msra.mxu0 %v36
  %128 = vmatprep.subr.mxu0 %v42
  %129 = vmatpush1.msra.mxu0 %v41
  %130 = vmatprep.subr.mxu0 %v47
  %131 = vmatpush1.msra.mxu0 %v46
  %132 = vmatprep.subr.mxu0 %v52
  %133 = vmatpush1.msra.mxu0 %v51
  %134 = vmatprep.subr.mxu0 %v57
  %135 = vmatpush1.msra.mxu0 %v56
  %136 = vmatprep.subr.mxu0 %v62
  %137 = vmatpush1.msra.mxu0 %v61
  %138 = vmatprep.subr.mxu0 %v67
  %139 = vmatpush1.msra.mxu0 %v66
  %140 = vmatprep.subr.mxu0 %v72
  %141 = vmatpush1.msra.mxu0 %v71
  %142 = vmatprep.subr.mxu0 %v77
  %143 = vmatpush1.msra.mxu0 %v76
  %144 = vmatprep.subr.mxu0 0.0
  %145 = vmatpush1.msra.mxu0 0.0
  %146 = vmatprep.subr.mxu0 0.0
  %147 = vmatpush1.msra.mxu0 0.0
  %148 = vmatprep.subr.mxu0 0.0
  %149 = vmatpush1.msra.mxu0 0.0
  %150 = vmatprep.subr.mxu0 0.0
  %151 = vmatpush1.msra.mxu0 0.0
  %152 = vmatprep.subr.mxu0 0.0
  %153 = vmatpush1.msra.mxu0 0.0
  %154 = vmatprep.subr.mxu0 0.0
  %155 = vmatpush1.msra.mxu0 0.0
  %156 = vmatprep.subr.mxu0 0.0
  %157 = vmatpush1.msra.mxu0 0.0
  %158 = vmatprep.subr.mxu0 0.0
  %159 = vmatpush1.msra.mxu0 0.0
  %160 = vmatprep.subr.mxu0 0.0
  %161 = vmatpush1.msra.mxu0 0.0
  %162 = vmatprep.subr.mxu0 0.0
  %163 = vmatpush1.msra.mxu0 0.0
  %164 = vmatprep.subr.mxu0 0.0
  %165 = vmatpush1.msra.mxu0 0.0
  %166 = vmatprep.subr.mxu0 0.0
  %167 = vmatpush1.msra.mxu0 0.0
  %168 = vmatprep.subr.mxu0 0.0
  %169 = vmatpush1.msra.mxu0 0.0
  %170 = vmatprep.subr.mxu0 0.0
  %171 = vmatpush1.msra.mxu0 0.0
  %172 = vmatprep.subr.mxu0 0.0
  %173 = vmatpush1.msra.mxu0 0.0
  %174 = vmatprep.subr.mxu0 0.0
  %175 = vmatpush1.msra.mxu0 0.0
  %176 = vmatprep.subr.mxu0 0.0
  %177 = vmatpush1.msra.mxu0 0.0
  %178 = vmatprep.subr.mxu0 0.0
  %179 = vmatpush1.msra.mxu0 0.0
  %180 = vmatprep.subr.mxu0 0.0
  %181 = vmatpush1.msra.mxu0 0.0
  %182 = vmatprep.subr.mxu0 0.0
  %183 = vmatpush1.msra.mxu0 0.0
  %184 = vmatprep.subr.mxu0 0.0
  %185 = vmatpush1.msra.mxu0 0.0
  %186 = vmatprep.subr.mxu0 0.0
  %187 = vmatpush1.msra.mxu0 0.0
  %188 = vmatprep.mubr.f32.mxu0 0.0
  %189 = vmatmul.mubr.f32.gmra.mrb[0].mxu0 %v110
  %v190 = vpop.f32.mrb[0].mxu0
  %v191 = vadd.f32 %v86, %v190
  %v192 = vpop.f32.mrb[0].mxu0
  %v193 = vadd.f32 %v90, %v192
  %194 = vmatprep.mubr.f32.mxu0 0.0
  %195 = vmatmul.mubr.f32.gmra.mrb[0].mxu0 %v113
  %v196 = vpop.f32.mrb[0].mxu0
  %v197 = vadd.f32 %v86, %v196
  %v198 = vpop.f32.mrb[0].mxu0
  %v199 = vadd.f32 %v90, %v198
  %200 = vmatprep.mubr.f32.mxu0 0.0
  %201 = vmatmul.mubr.f32.gmra.mrb[0].mxu0 %v116
  %v202 = vpop.f32.mrb[0].mxu0
  %v203 = vadd.f32 %v86, %v202
  %v204 = vpop.f32.mrb[0].mxu0
  %v205 = vadd.f32 %v90, %v204
  %206 = vmatprep.mubr.f32.mxu0 0.0
  %207 = vmatmul.mubr.f32.gmra.mrb[0].mxu0 %v119
  %v208 = vpop.f32.mrb[0].mxu0
  %v209 = vadd.f32 %v86, %v208
  %v210 = vpop.f32.mrb[0].mxu0
  %v211 = vadd.f32 %v90, %v210
  %212 = vmatprep.mubr.f32.mxu0 0.0
  %213 = vmatmul.mubr.f32.gmra.mrb[0].mxu0 %v122
  %v214 = vpop.f32.mrb[0].mxu0
  %v215 = vadd.f32 %v86, %v214
  %v216 = vpop.f32.mrb[0].mxu0
  %v217 = vadd.f32 %v90, %v216
  %218 = vdwg.mxu0
  %219 = vmatprep.subr.mxu0 %v34
  %220 = vmatpush1.msra.mxu0 %v33
  %221 = vmatprep.subr.mxu0 %v39
  %222 = vmatpush1.msra.mxu0 %v38
  %223 = vmatprep.subr.mxu0 %v44
  %224 = vmatpush1.msra.mxu0 %v43
  %225 = vmatprep.subr.mxu0 %v49
  %226 = vmatpush1.msra.mxu0 %v48
  %227 = vmatprep.subr.mxu0 %v54
  %228 = vmatpush1.msra.mxu0 %v53
  %229 = vmatprep.subr.mxu0 %v59
  %230 = vmatpush1.msra.mxu0 %v58
  %231 = vmatprep.subr.mxu0 %v64
  %232 = vmatpush1.msra.mxu0 %v63
  %233 = vmatprep.subr.mxu0 %v69
  %234 = vmatpush1.msra.mxu0 %v68
  %235 = vmatprep.subr.mxu0 %v74
  %236 = vmatpush1.msra.mxu0 %v73
  %237 = vmatprep.subr.mxu0 %v79
  %238 = vmatpush1.msra.mxu0 %v78
  %239 = vmatprep.subr.mxu0 0.0
  %240 = vmatpush1.msra.mxu0 0.0
  %241 = vmatprep.subr.mxu0 0.0
  %242 = vmatpush1.msra.mxu0 0.0
  %243 = vmatprep.subr.mxu0 0.0
  %244 = vmatpush1.msra.mxu0 0.0
  %245 = vmatprep.subr.mxu0 0.0
  %246 = vmatpush1.msra.mxu0 0.0
  %247 = vmatprep.subr.mxu0 0.0
  %248 = vmatpush1.msra.mxu0 0.0
  %249 = vmatprep.subr.mxu0 0.0
  %250 = vmatpush1.msra.mxu0 0.0
  %251 = vmatprep.subr.mxu0 0.0
  %252 = vmatpush1.msra.mxu0 0.0
  %253 = vmatprep.subr.mxu0 0.0
  %254 = vmatpush1.msra.mxu0 0.0
  %255 = vmatprep.subr.mxu0 0.0
  %256 = vmatpush1.msra.mxu0 0.0
  %257 = vmatprep.subr.mxu0 0.0
  %258 = vmatpush1.msra.mxu0 0.0
  %259 = vmatprep.subr.mxu0 0.0
  %260 = vmatpush1.msra.mxu0 0.0
  %261 = vmatprep.subr.mxu0 0.0
  %262 = vmatpush1.msra.mxu0 0.0
  %263 = vmatprep.subr.mxu0 0.0
  %264 = vmatpush1.msra.mxu0 0.0
  %265 = vmatprep.subr.mxu0 0.0
  %266 = vmatpush1.msra.mxu0 0.0
  %267 = vmatprep.subr.mxu0 0.0
  %268 = vmatpush1.msra.mxu0 0.0
  %269 = vmatprep.subr.mxu0 0.0
  %270 = vmatpush1.msra.mxu0 0.0
  %271 = vmatprep.subr.mxu0 0.0
  %272 = vmatpush1.msra.mxu0 0.0
  %273 = vmatprep.subr.mxu0 0.0
  %274 = vmatpush1.msra.mxu0 0.0
  %275 = vmatprep.subr.mxu0 0.0
  %276 = vmatpush1.msra.mxu0 0.0
  %277 = vmatprep.subr.mxu0 0.0
  %278 = vmatpush1.msra.mxu0 0.0
  %279 = vmatprep.subr.mxu0 0.0
  %280 = vmatpush1.msra.mxu0 0.0
  %281 = vmatprep.subr.mxu0 0.0
  %282 = vmatpush1.msra.mxu0 0.0
  %283 = vmatprep.mubr.f32.mxu0 0.0
  %284 = vmatmul.mubr.f32.gmra.mrb[0].mxu0 %v110
  %v285 = vpop.f32.mrb[0].mxu0
  %v286 = vadd.f32 %v94, %v285
  %v287 = vpop.f32.mrb[0].mxu0
  %v288 = vadd.f32 %v98, %v287
  %289 = vmatprep.mubr.f32.mxu0 0.0
  %290 = vmatmul.mubr.f32.gmra.mrb[0].mxu0 %v113
  %v291 = vpop.f32.mrb[0].mxu0
  %v292 = vadd.f32 %v94, %v291
  %v293 = vpop.f32.mrb[0].mxu0
  %v294 = vadd.f32 %v98, %v293
  %295 = vmatprep.mubr.f32.mxu0 0.0
  %296 = vmatmul.mubr.f32.gmra.mrb[0].mxu0 %v116
  %v297 = vpop.f32.mrb[0].mxu0
  %v298 = vadd.f32 %v94, %v297
  %v299 = vpop.f32.mrb[0].mxu0
  %v300 = vadd.f32 %v98, %v299
  %301 = vmatprep.mubr.f32.mxu0 0.0
  %302 = vmatmul.mubr.f32.gmra.mrb[0].mxu0 %v119
  %v303 = vpop.f32.mrb[0].mxu0
  %v304 = vadd.f32 %v94, %v303
  %v305 = vpop.f32.mrb[0].mxu0
  %v306 = vadd.f32 %v98, %v305
  %307 = vmatprep.mubr.f32.mxu0 0.0
  %308 = vmatmul.mubr.f32.gmra.mrb[0].mxu0 %v122
  %v309 = vpop.f32.mrb[0].mxu0
  %v310 = vadd.f32 %v94, %v309
  %v311 = vpop.f32.mrb[0].mxu0
  %v312 = vadd.f32 %v98, %v311
  %313 = vdwg.mxu0
  %314 = vmatprep.subr.mxu0 0.0
  %315 = vmatpush1.msra.mxu0 %v35
  %316 = vmatprep.subr.mxu0 0.0
  %317 = vmatpush1.msra.mxu0 %v40
  %318 = vmatprep.subr.mxu0 0.0
  %319 = vmatpush1.msra.mxu0 %v45
  %320 = vmatprep.subr.mxu0 0.0
  %321 = vmatpush1.msra.mxu0 %v50
  %322 = vmatprep.subr.mxu0 0.0
  %323 = vmatpush1.msra.mxu0 %v55
  %324 = vmatprep.subr.mxu0 0.0
  %325 = vmatpush1.msra.mxu0 %v60
  %326 = vmatprep.subr.mxu0 0.0
  %327 = vmatpush1.msra.mxu0 %v65
  %328 = vmatprep.subr.mxu0 0.0
  %329 = vmatpush1.msra.mxu0 %v70
  %330 = vmatprep.subr.mxu0 0.0
  %331 = vmatpush1.msra.mxu0 %v75
  %332 = vmatprep.subr.mxu0 0.0
  %333 = vmatpush1.msra.mxu0 %v80
  %334 = vmatprep.subr.mxu0 0.0
  %335 = vmatpush1.msra.mxu0 0.0
  %336 = vmatprep.subr.mxu0 0.0
  %337 = vmatpush1.msra.mxu0 0.0
  %338 = vmatprep.subr.mxu0 0.0
  %339 = vmatpush1.msra.mxu0 0.0
  %340 = vmatprep.subr.mxu0 0.0
  %341 = vmatpush1.msra.mxu0 0.0
  %342 = vmatprep.subr.mxu0 0.0
  %343 = vmatpush1.msra.mxu0 0.0
  %344 = vmatprep.subr.mxu0 0.0
  %345 = vmatpush1.msra.mxu0 0.0
  %346 = vmatprep.subr.mxu0 0.0
  %347 = vmatpush1.msra.mxu0 0.0
  %348 = vmatprep.subr.mxu0 0.0
  %349 = vmatpush1.msra.mxu0 0.0
  %350 = vmatprep.subr.mxu0 0.0
  %351 = vmatpush1.msra.mxu0 0.0
  %352 = vmatprep.subr.mxu0 0.0
  %353 = vmatpush1.msra.mxu0 0.0
  %354 = vmatprep.subr.mxu0 0.0
  %355 = vmatpush1.msra.mxu0 0.0
  %356 = vmatprep.subr.mxu0 0.0
  %357 = vmatpush1.msra.mxu0 0.0
  %358 = vmatprep.subr.mxu0 0.0
  %359 = vmatpush1.msra.mxu0 0.0
  %360 = vmatprep.subr.mxu0 0.0
  %361 = vmatpush1.msra.mxu0 0.0
  %362 = vmatprep.subr.mxu0 0.0
  %363 = vmatpush1.msra.mxu0 0.0
  %364 = vmatprep.subr.mxu0 0.0
  %365 = vmatpush1.msra.mxu0 0.0
  %366 = vmatprep.subr.mxu0 0.0
  %367 = vmatpush1.msra.mxu0 0.0
  %368 = vmatprep.subr.mxu0 0.0
  %369 = vmatpush1.msra.mxu0 0.0
  %370 = vmatprep.subr.mxu0 0.0
  %371 = vmatpush1.msra.mxu0 0.0
  %372 = vmatprep.subr.mxu0 0.0
  %373 = vmatpush1.msra.mxu0 0.0
  %374 = vmatprep.subr.mxu0 0.0
  %375 = vmatpush1.msra.mxu0 0.0
  %376 = vmatprep.subr.mxu0 0.0
  %377 = vmatpush1.msra.mxu0 0.0
  %378 = vmatprep.mubr.f32.mxu0 0.0
  %379 = vmatmul.mubr.f32.gmra.mrb[0].mxu0 %v110
  %v380 = vpop.f32.mrb[0].mxu0
  %v381 = vadd.f32 %v102, %v380
  %v382 = vpop.f32.mrb[0].mxu0
  %383 = vmatprep.mubr.f32.mxu0 0.0
  %384 = vmatmul.mubr.f32.gmra.mrb[0].mxu0 %v113
  %v385 = vpop.f32.mrb[0].mxu0
  %v386 = vadd.f32 %v102, %v385
  %v387 = vpop.f32.mrb[0].mxu0
  %388 = vmatprep.mubr.f32.mxu0 0.0
  %389 = vmatmul.mubr.f32.gmra.mrb[0].mxu0 %v116
  %v390 = vpop.f32.mrb[0].mxu0
  %v391 = vadd.f32 %v102, %v390
  %v392 = vpop.f32.mrb[0].mxu0
  %393 = vmatprep.mubr.f32.mxu0 0.0
  %394 = vmatmul.mubr.f32.gmra.mrb[0].mxu0 %v119
  %v395 = vpop.f32.mrb[0].mxu0
  %v396 = vadd.f32 %v102, %v395
  %v397 = vpop.f32.mrb[0].mxu0
  %398 = vmatprep.mubr.f32.mxu0 0.0
  %399 = vmatmul.mubr.f32.gmra.mrb[0].mxu0 %v122
  %v400 = vpop.f32.mrb[0].mxu0
  %v401 = vadd.f32 %v102, %v400
  %v402 = vpop.f32.mrb[0].mxu0
  %403 = vdwg.mxu0
  %v404 = vmax.f32 %v191, 0.0
  %v405 = vmax.f32 %v193, 0.0
  %v406 = vmax.f32 %v286, 0.0
  %v407 = vmax.f32 %v288, 0.0
  %v408 = vmax.f32 %v381, 0.0
  %v409 = vmax.f32 %v197, 0.0
  %v410 = vmax.f32 %v199, 0.0
  %v411 = vmax.f32 %v292, 0.0
  %v412 = vmax.f32 %v294, 0.0
  %v413 = vmax.f32 %v386, 0.0
  %v414 = vmax.f32 %v203, 0.0
  %v415 = vmax.f32 %v205, 0.0
  %v416 = vmax.f32 %v298, 0.0
  %v417 = vmax.f32 %v300, 0.0
  %v418 = vmax.f32 %v391, 0.0
  %v419 = vmax.f32 %v209, 0.0
  %v420 = vmax.f32 %v211, 0.0
  %v421 = vmax.f32 %v304, 0.0
  %v422 = vmax.f32 %v306, 0.0
  %v423 = vmax.f32 %v396, 0.0
  %v424 = vmax.f32 %v215, 0.0
  %v425 = vmax.f32 %v217, 0.0
  %v426 = vmax.f32 %v310, 0.0
  %v427 = vmax.f32 %v312, 0.0
  %v428 = vmax.f32 %v401, 0.0
  %v429 = vmax.f32 %v404, %v405
  %v430 = vmax.f32 %v409, %v410
  %v431 = vmax.f32 %v414, %v415
  %v432 = vmax.f32 %v419, %v420
  %v433 = vmax.f32 %v424, %v425
  %v434 = vmax.f32 %v429, %v406
  %v435 = vmax.f32 %v430, %v411
  %v436 = vmax.f32 %v431, %v416
  %v437 = vmax.f32 %v432, %v421
  %v438 = vmax.f32 %v433, %v426
  %v439 = vmax.f32 %v434, %v407
  %v440 = vmax.f32 %v435, %v412
  %v441 = vmax.f32 %v436, %v417
  %v442 = vmax.f32 %v437, %v422
  %v443 = vmax.f32 %v438, %v427
  %v444 = vmax.f32 %v439, %v408
  %v445 = vmax.f32 %v440, %v413
  %v446 = vmax.f32 %v441, %v418
  %v447 = vmax.f32 %v442, %v423
  %v448 = vmax.f32 %v443, %v428
  %v449 = vld [vmem:[%s0] sm:$0xff]
  %v450 = vld [vmem:[%s0 + $0x8] sm:$0xff]
  %v451 = vld [vmem:[%s0 + $0x10] sm:$0xff]
  %v452 = vld [vmem:[%s0 + $0x18] sm:$0xff]
  %v453 = vld [vmem:[%s0 + $0x20] sm:$0xff]
  %v454 = vld [vmem:[%s4] sm:$0xff]
  %v455 = vld [vmem:[%s4 + $0x8] sm:$0xff]
  %v456 = vld [vmem:[%s4 + $0x10] sm:$0xff]
  %v457 = vld [vmem:[%s5] sm:$0xff]
  %v458 = vld [vmem:[%s5 + $0x8] sm:$0xff]
  %v459 = vld [vmem:[%s5 + $0x10] sm:$0xff]
  %v460 = vld [vmem:[%s5 + $0x18] sm:$0xff]
  %v461 = vld [vmem:[%s5 + $0x20] sm:$0xff]
  %v462 = vld [vmem:[%s5 + $0x28] sm:$0xff]
  %v463 = vld [vmem:[%s5 + $0x30] sm:$0xff]
  %v464 = vld [vmem:[%s5 + $0x38] sm:$0xff]
  %v465 = vld [vmem:[%s5 + $0x40] sm:$0xff]
  %v466 = vld [vmem:[%s5 + $0x48] sm:$0xff]
  %v467 = vld [vmem:[%s5 + $0x50] sm:$0xff]
  %v468 = vld [vmem:[%s5 + $0x58] sm:$0xff]
  %v469 = vld [vmem:[%s5 + $0x60] sm:$0xff]
  %v470 = vld [vmem:[%s5 + $0x68] sm:$0xff]
  %v471 = vld [vmem:[%s5 + $0x70] sm:$0xff]
  %v472 = vld [vmem:[%s5 + $0x78] sm:$0xff]
  %473 = vmatprep.subr.mxu0 0.0
  %474 = vmatpush1.msra.mxu0 %v457
  %475 = vmatprep.subr.mxu0 0.0
  %476 = vmatpush1.msra.mxu0 %v458
  %477 = vmatprep.subr.mxu0 0.0
  %478 = vmatpush1.msra.mxu0 %v459
  %479 = vmatprep.subr.mxu0 0.0
  %480 = vmatpush1.msra.mxu0 %v460
  %481 = vmatprep.subr.mxu0 0.0
  %482 = vmatpush1.msra.mxu0 %v461
  %483 = vmatprep.subr.mxu0 0.0
  %484 = vmatpush1.msra.mxu0 %v462
  %485 = vmatprep.subr.mxu0 0.0
  %486 = vmatpush1.msra.mxu0 %v463
  %487 = vmatprep.subr.mxu0 0.0
  %488 = vmatpush1.msra.mxu0 %v464
  %489 = vmatprep.subr.mxu0 0.0
  %490 = vmatpush1.msra.mxu0 %v465
  %491 = vmatprep.subr.mxu0 0.0
  %492 = vmatpush1.msra.mxu0 %v466
  %493 = vmatprep.subr.mxu0 0.0
  %494 = vmatpush1.msra.mxu0 %v467
  %495 = vmatprep.subr.mxu0 0.0
  %496 = vmatpush1.msra.mxu0 %v468
  %497 = vmatprep.subr.mxu0 0.0
  %498 = vmatpush1.msra.mxu0 %v469
  %499 = vmatprep.subr.mxu0 0.0
  %500 = vmatpush1.msra.mxu0 %v470
  %501 = vmatprep.subr.mxu0 0.0
  %502 = vmatpush1.msra.mxu0 %v471
  %503 = vmatprep.subr.mxu0 0.0
  %504 = vmatpush1.msra.mxu0 %v472
  %505 = vmatprep.subr.mxu0 0.0
  %506 = vmatpush1.msra.mxu0 0.0
  %507 = vmatprep.subr.mxu0 0.0
  %508 = vmatpush1.msra.mxu0 0.0
  %509 = vmatprep.subr.mxu0 0.0
  %510 = vmatpush1.msra.mxu0 0.0
  %511 = vmatprep.subr.mxu0 0.0
  %512 = vmatpush1.msra.mxu0 0.0
  %513 = vmatprep.subr.mxu0 0.0
  %514 = vmatpush1.msra.mxu0 0.0
  %515 = vmatprep.subr.mxu0 0.0
  %516 = vmatpush1.msra.mxu0 0.0
  %517 = vmatprep.subr.mxu0 0.0
  %518 = vmatpush1.msra.mxu0 0.0
  %519 = vmatprep.subr.mxu0 0.0
  %520 = vmatpush1.msra.mxu0 0.0
  %521 = vmatprep.subr.mxu0 0.0
  %522 = vmatpush1.msra.mxu0 0.0
  %523 = vmatprep.subr.mxu0 0.0
  %524 = vmatpush1.msra.mxu0 0.0
  %525 = vmatprep.subr.mxu0 0.0
  %526 = vmatpush1.msra.mxu0 0.0
  %527 = vmatprep.subr.mxu0 0.0
  %528 = vmatpush1.msra.mxu0 0.0
  %529 = vmatprep.subr.mxu0 0.0
  %530 = vmatpush1.msra.mxu0 0.0
  %531 = vmatprep.subr.mxu0 0.0
  %532 = vmatpush1.msra.mxu0 0.0
  %533 = vmatprep.subr.mxu0 0.0
  %534 = vmatpush1.msra.mxu0 0.0
  %535 = vmatprep.subr.mxu0 0.0
  %536 = vmatpush1.msra.mxu0 0.0
  %537 = vmatprep.mubr.f32.mxu0 0.0
  %538 = vmatmul.mubr.f32.gmra.mrb[0].mxu0 %v444
  %v539 = vpop.f32.mrb[0].mxu0
  %v540 = vadd.f32 0.0, %v539
  %v541 = vpop.f32.mrb[0].mxu0
  %542 = vmatprep.mubr.f32.mxu0 0.0
  %543 = vmatmul.mubr.f32.gmra.mrb[0].mxu0 %v445
  %v544 = vpop.f32.mrb[0].mxu0
  %v545 = vadd.f32 0.0, %v544
  %v546 = vpop.f32.mrb[0].mxu0
  %547 = vmatprep.mubr.f32.mxu0 0.0
  %548 = vmatmul.mubr.f32.gmra.mrb[0].mxu0 %v446
  %v549 = vpop.f32.mrb[0].mxu0
  %v550 = vadd.f32 0.0, %v549
  %v551 = vpop.f32.mrb[0].mxu0
  %552 = vmatprep.mubr.f32.mxu0 0.0
  %553 = vmatmul.mubr.f32.gmra.mrb[0].mxu0 %v447
  %v554 = vpop.f32.mrb[0].mxu0
  %v555 = vadd.f32 0.0, %v554
  %v556 = vpop.f32.mrb[0].mxu0
  %557 = vmatprep.mubr.f32.mxu0 0.0
  %558 = vmatmul.mubr.f32.gmra.mrb[0].mxu0 %v448
  %v559 = vpop.f32.mrb[0].mxu0
  %v560 = vadd.f32 0.0, %v559
  %v561 = vpop.f32.mrb[0].mxu0
  %562 = vdwg.mxu0
  %vm563 = vcmask 195584
  %v565 = vsel %vm563, %v449, 0
  %v568 = vsel %vm563, %v450, 0
  %v571 = vsel %vm563, %v451, 0
  %v574 = vsel %vm563, %v452, 0
  %v577 = vsel %vm563, %v453, 0
  %579 = vmatprep.subr.mxu0 0.0
  %580 = vmatpush1.msra.mxu0 %v454
  %581 = vmatprep.subr.mxu0 0.0
  %582 = vmatpush1.msra.mxu0 %v455
  %583 = vmatprep.subr.mxu0 0.0
  %584 = vmatpush1.msra.mxu0 %v456
  %585 = vmatprep.subr.mxu0 0.0
  %586 = vmatpush1.msra.mxu0 0.0
  %587 = vmatprep.subr.mxu0 0.0
  %588 = vmatpush1.msra.mxu0 0.0
  %589 = vmatprep.subr.mxu0 0.0
  %590 = vmatpush1.msra.mxu0 0.0
  %591 = vmatprep.subr.mxu0 0.0
  %592 = vmatpush1.msra.mxu0 0.0
  %593 = vmatprep.subr.mxu0 0.0
  %594 = vmatpush1.msra.mxu0 0.0
  %595 = vmatprep.subr.mxu0 0.0
  %596 = vmatpush1.msra.mxu0 0.0
  %597 = vmatprep.subr.mxu0 0.0
  %598 = vmatpush1.msra.mxu0 0.0
  %599 = vmatprep.subr.mxu0 0.0
  %600 = vmatpush1.msra.mxu0 0.0
  %601 = vmatprep.subr.mxu0 0.0
  %602 = vmatpush1.msra.mxu0 0.0
  %603 = vmatprep.subr.mxu0 0.0
  %604 = vmatpush1.msra.mxu0 0.0
  %605 = vmatprep.subr.mxu0 0.0
  %606 = vmatpush1.msra.mxu0 0.0
  %607 = vmatprep.subr.mxu0 0.0
  %608 = vmatpush1.msra.mxu0 0.0
  %609 = vmatprep.subr.mxu0 0.0
  %610 = vmatpush1.msra.mxu0 0.0
  %611 = vmatprep.subr.mxu0 0.0
  %612 = vmatpush1.msra.mxu0 0.0
  %613 = vmatprep.subr.mxu0 0.0
  %614 = vmatpush1.msra.mxu0 0.0
  %615 = vmatprep.subr.mxu0 0.0
  %616 = vmatpush1.msra.mxu0 0.0
  %617 = vmatprep.subr.mxu0 0.0
  %618 = vmatpush1.msra.mxu0 0.0
  %619 = vmatprep.subr.mxu0 0.0
  %620 = vmatpush1.msra.mxu0 0.0
  %621 = vmatprep.subr.mxu0 0.0
  %622 = vmatpush1.msra.mxu0 0.0
  %623 = vmatprep.subr.mxu0 0.0
  %624 = vmatpush1.msra.mxu0 0.0
  %625 = vmatprep.subr.mxu0 0.0
  %626 = vmatpush1.msra.mxu0 0.0
  %627 = vmatprep.subr.mxu0 0.0
  %628 = vmatpush1.msra.mxu0 0.0
  %629 = vmatprep.subr.mxu0 0.0
  %630 = vmatpush1.msra.mxu0 0.0
  %631 = vmatprep.subr.mxu0 0.0
  %632 = vmatpush1.msra.mxu0 0.0
  %633 = vmatprep.subr.mxu0 0.0
  %634 = vmatpush1.msra.mxu0 0.0
  %635 = vmatprep.subr.mxu0 0.0
  %636 = vmatpush1.msra.mxu0 0.0
  %637 = vmatprep.subr.mxu0 0.0
  %638 = vmatpush1.msra.mxu0 0.0
  %639 = vmatprep.subr.mxu0 0.0
  %640 = vmatpush1.msra.mxu0 0.0
  %641 = vmatprep.subr.mxu0 0.0
  %642 = vmatpush1.msra.mxu0 0.0
  %643 = vmatprep.mubr.f32.mxu0 0.0
  %644 = vmatmul.mubr.f32.gmra.mrb[0].mxu0 %v565
  %v645 = vpop.f32.mrb[0].mxu0
  %v646 = vadd.f32 %v540, %v645
  %v647 = vpop.f32.mrb[0].mxu0
  %648 = vmatprep.mubr.f32.mxu0 0.0
  %649 = vmatmul.mubr.f32.gmra.mrb[0].mxu0 %v568
  %v650 = vpop.f32.mrb[0].mxu0
  %v651 = vadd.f32 %v545, %v650
  %v652 = vpop.f32.mrb[0].mxu0
  %653 = vmatprep.mubr.f32.mxu0 0.0
  %654 = vmatmul.mubr.f32.gmra.mrb[0].mxu0 %v571
  %v655 = vpop.f32.mrb[0].mxu0
  %v656 = vadd.f32 %v550, %v655
  %v657 = vpop.f32.mrb[0].mxu0
  %658 = vmatprep.mubr.f32.mxu0 0.0
  %659 = vmatmul.mubr.f32.gmra.mrb[0].mxu0 %v574
  %v660 = vpop.f32.mrb[0].mxu0
  %v661 = vadd.f32 %v555, %v660
  %v662 = vpop.f32.mrb[0].mxu0
  %663 = vmatprep.mubr.f32.mxu0 0.0
  %664 = vmatmul.mubr.f32.gmra.mrb[0].mxu0 %v577
  %v665 = vpop.f32.mrb[0].mxu0
  %v666 = vadd.f32 %v560, %v665
  %v667 = vpop.f32.mrb[0].mxu0
  %668 = vdwg.mxu0
  %v669 = vld [vmem:[%s6] sm:$0x1]
  %v671 = vlaneseq
  %v672 = vshrl.u32 %v671, 7
  %v673 = vsub.s32 0, %v672
  %v674 = vrot.slane %v669, %v673
  %v676 = vadd.f32 %v646, %v674
  %v677 = vadd.f32 %v651, %v674
  %v678 = vadd.f32 %v656, %v674
  %v679 = vadd.f32 %v661, %v674
  %v680 = vadd.f32 %v666, %v674
  %v681 = vmax.f32 %v676, 0.0
  %v682 = vmax.f32 %v677, 0.0
  %v683 = vmax.f32 %v678, 0.0
  %v684 = vmax.f32 %v679, 0.0
  %v685 = vmax.f32 %v680, 0.0
  %686 = vst [vmem:[%s7] sm:$0xff] %v681
  %687 = vst [vmem:[%s7 + $0x8] sm:$0xff] %v682
  %688 = vst [vmem:[%s7 + $0x10] sm:$0xff] %v683
  %689 = vst [vmem:[%s7 + $0x18] sm:$0xff] %v684
  %690 = vst [vmem:[%s7 + $0x20] sm:$0xff] %v685
  // Predicated region
  $region30: #{object_encoder_forward.1} parent=0 // pred_check
    _
  $region31: #{object_encoder_forward.1} parent=0 // pred_check_branch
    %692 = sbr.rel (0) target = $region33
  $region32: #{object_encoder_forward.1} parent=0 // pred_region
    _
  $region33: #{object_encoder_forward.1} parent=0 // pred_fallthru
    _
  // Predicated region
  $region34: #{object_encoder_forward.1} parent=0 // pred_check
    _
  $region35: #{object_encoder_forward.1} parent=0 // pred_check_branch
    %694 = sbr.rel (0) target = $region37
  $region36: #{object_encoder_forward.1} parent=0 // pred_region
    _
  $region37: #{object_encoder_forward.1} parent=0 // pred_fallthru
    _

</llo_original>
